<compile_context>
chip_gen: v6e
topology: v6e:2x2x1
jax: 0.10.0
libtpu: 0.0.40
codegen_flags: <defaults>
</compile_context>

<pallas_src>
import numpy as np
import jax
import jax.numpy as jnp
from jax.experimental import pallas as pl
from jax.experimental.pallas import tpu as pltpu

EPS = 1e-5  # PyTorch LayerNorm default


def positional_encoding(position, d_model):
    pos = np.arange(position)[:, np.newaxis]
    i = np.arange(d_model)[np.newaxis, :]
    angle_rates = 1.0 / np.power(10000, 2 * (i // 2) / np.float32(d_model))
    angle_rads = pos * angle_rates
    angle_rads[:, 0::2] = np.sin(angle_rads[:, 0::2])
    angle_rads[:, 1::2] = np.cos(angle_rads[:, 1::2])
    return angle_rads[np.newaxis, ...].astype("float32")  # (1, position, d_model)


def _layernorm(x, gamma, beta):
    mu = jnp.mean(x, axis=-1, keepdims=True)
    var = jnp.mean((x - mu) ** 2, axis=-1, keepdims=True)
    return (x - mu) * jax.lax.rsqrt(var + EPS) * gamma + beta


def _embedding_kernel(x_ref, ln1_ref, w_ref, dpar_ref, pos_ref, o_ref):
    tb, ts, F = x_ref.shape
    D = w_ref.shape[1]

    # Slice the packed parameter blocks once (each gamma/beta/bias is
    # broadcast exactly once inside its LayerNorm / add below).
    ln1 = ln1_ref[...]                         # (2, F)
    dpar = dpar_ref[...]                       # (5, D)
    g1, b1 = ln1[0:1, :], ln1[1:2, :]
    bl = dpar[0:1, :]
    g2, b2 = dpar[1:2, :], dpar[2:3, :]
    g3, b3 = dpar[3:4, :], dpar[4:5, :]

    # (tile_b, tile_s, F) -> (rows, F): leading-dim merge, no relayout.
    x = x_ref[...].reshape(tb * ts, F)

    h = _layernorm(x, g1, b1)                                    # LayerNorm(F)
    # Dropout -> identity (inference).
    h = jnp.dot(h, w_ref[...], preferred_element_type=jnp.float32) + bl  # Linear
    h = jnp.maximum(h, 0.0)                                      # ReLU
    h = _layernorm(h, g2, b2)                                    # LayerNorm(D)
    h = h.reshape(tb, ts, D) + pos_ref[...]                      # + pos encoding
    h = _layernorm(h, g3, b3)                                    # final LayerNorm(D)
    # Dropout -> identity (inference).

    if h.shape != o_ref.shape:
        # Lane-dense store: (ts, D) f32 row-major == (ts*D/128, 128).
        h = h.reshape(o_ref.shape)
    o_ref[...] = h


def _round_up(n, m):
    return ((n + m - 1) // m) * m


def embedding_with_video(video_features, params, pos_encoding, *, block_rows=1024):
    """video_features: (B, S, F) f32.  Returns (B, S, d_model) f32."""
    B, S, F = video_features.shape
    D = params["w"].shape[1]

    # --- tiling: aim for ~block_rows rows per grid step -------------------
    tile_s = min(_round_up(S, 8), max(8, _round_up(block_rows, 8)))
    S_pad = _round_up(S, tile_s)
    n_s = S_pad // tile_s
    tile_b = max(1, min(B, block_rows // tile_s))
    # Keep >= 2 grid steps when possible so v7x can shard the grid across
    # its two TensorCores.
    if n_s * ((B + tile_b - 1) // tile_b) < 2 and B > 1:
        tile_b = (B + 1) // 2
    B_pad = _round_up(B, tile_b)
    n_b = B_pad // tile_b
    # VMEM per step (double-buffered x/pos/out + params) stays < ~1 MiB at the
    # default block_rows, far below all generations' scoped limits.

    # --- operands ----------------------------------------------------------
    x = video_features
    if (B_pad, S_pad) != (B, S):
        x = jnp.pad(x, ((0, B_pad - B), (0, S_pad - S), (0, 0)))
    pos = pos_encoding[0, :S, :]
    if S_pad != S:
        pos = jnp.pad(pos, ((0, S_pad - S), (0, 0)))
    ln1 = jnp.concatenate([params["g1"], params["b1"]], axis=0)          # (2, F)
    dpar = jnp.concatenate([params["bl"], params["g2"], params["b2"],
                            params["g3"], params["b3"]], axis=0)          # (5, D)

    in_specs = [
        pl.BlockSpec((tile_b, tile_s, F), lambda b, s: (b, s, 0)),   # x
        pl.BlockSpec((2, F), lambda b, s: (0, 0)),                   # LN1 gamma/beta
        pl.BlockSpec((F, D), lambda b, s: (0, 0)),                   # linear weight
        pl.BlockSpec((5, D), lambda b, s: (0, 0)),                   # bias + LN2/LN3
        pl.BlockSpec((tile_s, D), lambda b, s: (s, 0)),              # pos rows
    ]

    def run(pack_output):
        if pack_output:
            rows = tile_s * D // 128
            out_shape = jax.ShapeDtypeStruct((B_pad, S_pad * D // 128, 128),
                                             jnp.float32)
            out_spec = pl.BlockSpec((tile_b, rows, 128), lambda b, s: (b, s, 0))
        else:
            out_shape = jax.ShapeDtypeStruct((B_pad, S_pad, D), jnp.float32)
            out_spec = pl.BlockSpec((tile_b, tile_s, D), lambda b, s: (b, s, 0))

        out = pl.pallas_call(
            _embedding_kernel,
            out_shape=out_shape,
            grid_spec=pltpu.PrefetchScalarGridSpec(
                num_scalar_prefetch=0,
                grid=(n_b, n_s),
                in_specs=in_specs,
                out_specs=out_spec,
            ),
            compiler_params=pltpu.CompilerParams(
                dimension_semantics=("parallel", "parallel")),
        )(x, ln1, params["w"], dpar, pos)
        # Row-major bit-cast back to (B_pad, S_pad, D); slicing drops padding.
        return out.reshape(B_pad, S_pad, D)[:B, :S, :]

    pack_ok = (D % 128 != 0 and (tile_s * D) % 128 == 0
               and ((tile_s * D // 128) % 8 == 0 or n_s == 1))
    if pack_ok:
        try:
            return run(pack_output=True)
        except Exception:
            # Fallback if this Mosaic build cannot lower the sublane->lane
            # reshape used for the lane-dense store; semantics unchanged.
            pass
    return run(pack_output=False)


def make_params(key, F, D):
    """Deterministic synthetic parameters (PyTorch-style shapes, transposed linear)."""
    kw, kb = jax.random.split(key)
    bound = 1.0 / np.sqrt(F)
    w = jax.random.uniform(kw, (F, D), jnp.float32, -bound, bound)   # Linear.weight.T
    bl = jax.random.uniform(kb, (1, D), jnp.float32, -bound, bound)  # Linear.bias
    return {
        "g1": jnp.ones((1, F), jnp.float32), "b1": jnp.zeros((1, F), jnp.float32),
        "w": w, "bl": bl,
        "g2": jnp.ones((1, D), jnp.float32), "b2": jnp.zeros((1, D), jnp.float32),
        "g3": jnp.ones((1, D), jnp.float32), "b3": jnp.zeros((1, D), jnp.float32),
    }


def reference(video_features, params, pos_encoding):
    B, S, F = video_features.shape
    h = _layernorm(video_features, params["g1"][0], params["b1"][0])
    h = jnp.einsum("bsf,fd->bsd", h, params["w"]) + params["bl"][0]
    h = jnp.maximum(h, 0.0)
    h = _layernorm(h, params["g2"][0], params["b2"][0])
    h = h + pos_encoding[:, :S, :]
    h = _layernorm(h, params["g3"][0], params["b3"][0])
    return h


if __name__ == "__main__":
    # Small shapes consistent with the module's forward:
    B, S = 2, 8
    video_feature_size = 48
    d_model = 32
    maximum_position_encoding = 16

    key = jax.random.PRNGKey(0)
    kx, kp = jax.random.split(key)
    video_features = jax.random.normal(kx, (B, S, video_feature_size), jnp.float32)
    params = make_params(kp, video_feature_size, d_model)
    pos_enc = jnp.asarray(positional_encoding(maximum_position_encoding, d_model))

    out = embedding_with_video(video_features, params, pos_enc)
    out = jax.block_until_ready(out)

    ref = reference(video_features, params, pos_enc)
    np.testing.assert_allclose(np.asarray(out), np.asarray(ref), rtol=1e-5, atol=1e-5)

    print("KERNEL_OK")
</pallas_src>

<mosaic_0001>
module attributes {stable_mosaic.version = 11 : i64} {
  func.func @_embedding_kernel(%arg0: i32, %arg1: i32, %arg2: memref<1x8x48xf32, #tpu.memory_space<vmem>>, %arg3: memref<2x48xf32, #tpu.memory_space<vmem>>, %arg4: memref<48x32xf32, #tpu.memory_space<vmem>>, %arg5: memref<5x32xf32, #tpu.memory_space<vmem>>, %arg6: memref<8x32xf32, #tpu.memory_space<vmem>>, %arg7: memref<1x2x128xf32, #tpu.memory_space<vmem>>) attributes {dimension_semantics = [#tpu.dimension_semantics<parallel>, #tpu.dimension_semantics<parallel>], iteration_bounds = array<i64: 2, 1>, scalar_prefetch = 0 : i64, scratch_operands = 0 : i64, tpu.core_type = #tpu.core_type<tc>, window_params = [{transform_indices = @transform_0, window_bounds = array<i64: 1, 8, 48>}, {pipeline_mode = #tpu.pipeline_mode<synchronous>, transform_indices = @transform_1, window_bounds = array<i64: 2, 48>}, {pipeline_mode = #tpu.pipeline_mode<synchronous>, transform_indices = @transform_2, window_bounds = array<i64: 48, 32>}, {pipeline_mode = #tpu.pipeline_mode<synchronous>, transform_indices = @transform_3, window_bounds = array<i64: 5, 32>}, {transform_indices = @transform_4, window_bounds = array<i64: 8, 32>}, {transform_indices = @transform_5, window_bounds = array<i64: 1, 2, 128>}]} {
    %c0 = arith.constant 0 : index
    %c0_0 = arith.constant 0 : index
    %0 = vector.load %arg3[%c0, %c0_0] : memref<2x48xf32, #tpu.memory_space<vmem>>, vector<2x48xf32>
    %c0_1 = arith.constant 0 : index
    %c0_2 = arith.constant 0 : index
    %1 = vector.load %arg5[%c0_1, %c0_2] : memref<5x32xf32, #tpu.memory_space<vmem>>, vector<5x32xf32>
    %2 = vector.extract_strided_slice %0 {offsets = [0, 0], sizes = [1, 48], strides = [1, 1]} : vector<2x48xf32> to vector<1x48xf32>
    %3 = vector.extract_strided_slice %0 {offsets = [1, 0], sizes = [1, 48], strides = [1, 1]} : vector<2x48xf32> to vector<1x48xf32>
    %4 = vector.extract_strided_slice %1 {offsets = [0, 0], sizes = [1, 32], strides = [1, 1]} : vector<5x32xf32> to vector<1x32xf32>
    %5 = vector.extract_strided_slice %1 {offsets = [1, 0], sizes = [1, 32], strides = [1, 1]} : vector<5x32xf32> to vector<1x32xf32>
    %6 = vector.extract_strided_slice %1 {offsets = [2, 0], sizes = [1, 32], strides = [1, 1]} : vector<5x32xf32> to vector<1x32xf32>
    %7 = vector.extract_strided_slice %1 {offsets = [3, 0], sizes = [1, 32], strides = [1, 1]} : vector<5x32xf32> to vector<1x32xf32>
    %8 = vector.extract_strided_slice %1 {offsets = [4, 0], sizes = [1, 32], strides = [1, 1]} : vector<5x32xf32> to vector<1x32xf32>
    %c0_3 = arith.constant 0 : index
    %c0_4 = arith.constant 0 : index
    %c0_5 = arith.constant 0 : index
    %9 = vector.load %arg2[%c0_3, %c0_4, %c0_5] : memref<1x8x48xf32, #tpu.memory_space<vmem>>, vector<1x8x48xf32>
    %10 = vector.shape_cast %9 : vector<1x8x48xf32> to vector<8x48xf32>
    %cst = arith.constant dense<0.000000e+00> : vector<8xf32>
    %11 = vector.multi_reduction <add>, %10, %cst [1] : vector<8x48xf32> to vector<8xf32>
    %12 = vector.shape_cast %11 : vector<8xf32> to vector<8x1xf32>
    %cst_6 = arith.constant 4.800000e+01 : f32
    %13 = vector.broadcast %cst_6 : f32 to vector<8x1xf32>
    %14 = arith.divf %12, %13 : vector<8x1xf32>
    %15 = vector.broadcast %14 : vector<8x1xf32> to vector<8x48xf32>
    %16 = arith.subf %10, %15 : vector<8x48xf32>
    %17 = arith.mulf %16, %16 : vector<8x48xf32>
    %cst_7 = arith.constant dense<0.000000e+00> : vector<8xf32>
    %18 = vector.multi_reduction <add>, %17, %cst_7 [1] : vector<8x48xf32> to vector<8xf32>
    %19 = vector.shape_cast %18 : vector<8xf32> to vector<8x1xf32>
    %cst_8 = arith.constant 4.800000e+01 : f32
    %20 = vector.broadcast %cst_8 : f32 to vector<8x1xf32>
    %21 = arith.divf %19, %20 : vector<8x1xf32>
    %22 = vector.broadcast %14 : vector<8x1xf32> to vector<8x48xf32>
    %23 = arith.subf %10, %22 : vector<8x48xf32>
    %cst_9 = arith.constant 9.99999974E-6 : f32
    %24 = vector.broadcast %cst_9 : f32 to vector<8x1xf32>
    %25 = arith.addf %21, %24 : vector<8x1xf32>
    %26 = math.rsqrt %25 : vector<8x1xf32>
    %27 = vector.broadcast %26 : vector<8x1xf32> to vector<8x48xf32>
    %28 = arith.mulf %23, %27 : vector<8x48xf32>
    %29 = vector.broadcast %2 : vector<1x48xf32> to vector<8x48xf32>
    %30 = arith.mulf %28, %29 : vector<8x48xf32>
    %31 = vector.broadcast %3 : vector<1x48xf32> to vector<8x48xf32>
    %32 = arith.addf %30, %31 : vector<8x48xf32>
    %c0_10 = arith.constant 0 : index
    %c0_11 = arith.constant 0 : index
    %33 = vector.load %arg4[%c0_10, %c0_11] : memref<48x32xf32, #tpu.memory_space<vmem>>, vector<48x32xf32>
    %cst_12 = arith.constant dense<0.000000e+00> : vector<8x32xf32>
    %34 = tpu.matmul %32, %33, %cst_12 {dimension_numbers = #tpu.dot_dimension_numbers<[1], [0], [0], [1], [0, 0, 1, 1], [], []>} : vector<8x48xf32>, vector<48x32xf32>, vector<8x32xf32> -> vector<8x32xf32>
    %35 = vector.broadcast %4 : vector<1x32xf32> to vector<8x32xf32>
    %36 = arith.addf %34, %35 : vector<8x32xf32>
    %cst_13 = arith.constant 0.000000e+00 : f32
    %37 = vector.broadcast %cst_13 : f32 to vector<8x32xf32>
    %38 = arith.maximumf %36, %37 : vector<8x32xf32>
    %cst_14 = arith.constant dense<0.000000e+00> : vector<8xf32>
    %39 = vector.multi_reduction <add>, %38, %cst_14 [1] : vector<8x32xf32> to vector<8xf32>
    %40 = vector.shape_cast %39 : vector<8xf32> to vector<8x1xf32>
    %cst_15 = arith.constant 3.200000e+01 : f32
    %41 = vector.broadcast %cst_15 : f32 to vector<8x1xf32>
    %42 = arith.divf %40, %41 : vector<8x1xf32>
    %43 = vector.broadcast %42 : vector<8x1xf32> to vector<8x32xf32>
    %44 = arith.subf %38, %43 : vector<8x32xf32>
    %45 = arith.mulf %44, %44 : vector<8x32xf32>
    %cst_16 = arith.constant dense<0.000000e+00> : vector<8xf32>
    %46 = vector.multi_reduction <add>, %45, %cst_16 [1] : vector<8x32xf32> to vector<8xf32>
    %47 = vector.shape_cast %46 : vector<8xf32> to vector<8x1xf32>
    %cst_17 = arith.constant 3.200000e+01 : f32
    %48 = vector.broadcast %cst_17 : f32 to vector<8x1xf32>
    %49 = arith.divf %47, %48 : vector<8x1xf32>
    %50 = vector.broadcast %42 : vector<8x1xf32> to vector<8x32xf32>
    %51 = arith.subf %38, %50 : vector<8x32xf32>
    %cst_18 = arith.constant 9.99999974E-6 : f32
    %52 = vector.broadcast %cst_18 : f32 to vector<8x1xf32>
    %53 = arith.addf %49, %52 : vector<8x1xf32>
    %54 = math.rsqrt %53 : vector<8x1xf32>
    %55 = vector.broadcast %54 : vector<8x1xf32> to vector<8x32xf32>
    %56 = arith.mulf %51, %55 : vector<8x32xf32>
    %57 = vector.broadcast %5 : vector<1x32xf32> to vector<8x32xf32>
    %58 = arith.mulf %56, %57 : vector<8x32xf32>
    %59 = vector.broadcast %6 : vector<1x32xf32> to vector<8x32xf32>
    %60 = arith.addf %58, %59 : vector<8x32xf32>
    %61 = vector.shape_cast %60 : vector<8x32xf32> to vector<1x8x32xf32>
    %c0_19 = arith.constant 0 : index
    %c0_20 = arith.constant 0 : index
    %62 = vector.load %arg6[%c0_19, %c0_20] : memref<8x32xf32, #tpu.memory_space<vmem>>, vector<8x32xf32>
    %63 = vector.shape_cast %62 : vector<8x32xf32> to vector<1x8x32xf32>
    %64 = arith.addf %61, %63 : vector<1x8x32xf32>
    %cst_21 = arith.constant dense<0.000000e+00> : vector<1x8xf32>
    %65 = vector.multi_reduction <add>, %64, %cst_21 [2] : vector<1x8x32xf32> to vector<1x8xf32>
    %66 = vector.shape_cast %65 : vector<1x8xf32> to vector<1x8x1xf32>
    %cst_22 = arith.constant 3.200000e+01 : f32
    %67 = vector.broadcast %cst_22 : f32 to vector<1x8x1xf32>
    %68 = arith.divf %66, %67 : vector<1x8x1xf32>
    %69 = vector.broadcast %68 : vector<1x8x1xf32> to vector<1x8x32xf32>
    %70 = arith.subf %64, %69 : vector<1x8x32xf32>
    %71 = arith.mulf %70, %70 : vector<1x8x32xf32>
    %cst_23 = arith.constant dense<0.000000e+00> : vector<1x8xf32>
    %72 = vector.multi_reduction <add>, %71, %cst_23 [2] : vector<1x8x32xf32> to vector<1x8xf32>
    %73 = vector.shape_cast %72 : vector<1x8xf32> to vector<1x8x1xf32>
    %cst_24 = arith.constant 3.200000e+01 : f32
    %74 = vector.broadcast %cst_24 : f32 to vector<1x8x1xf32>
    %75 = arith.divf %73, %74 : vector<1x8x1xf32>
    %76 = vector.broadcast %68 : vector<1x8x1xf32> to vector<1x8x32xf32>
    %77 = arith.subf %64, %76 : vector<1x8x32xf32>
    %cst_25 = arith.constant 9.99999974E-6 : f32
    %78 = vector.broadcast %cst_25 : f32 to vector<1x8x1xf32>
    %79 = arith.addf %75, %78 : vector<1x8x1xf32>
    %80 = math.rsqrt %79 : vector<1x8x1xf32>
    %81 = vector.broadcast %80 : vector<1x8x1xf32> to vector<1x8x32xf32>
    %82 = arith.mulf %77, %81 : vector<1x8x32xf32>
    %83 = vector.shape_cast %7 : vector<1x32xf32> to vector<1x1x32xf32>
    %84 = vector.broadcast %83 : vector<1x1x32xf32> to vector<1x8x32xf32>
    %85 = arith.mulf %82, %84 : vector<1x8x32xf32>
    %86 = vector.shape_cast %8 : vector<1x32xf32> to vector<1x1x32xf32>
    %87 = vector.broadcast %86 : vector<1x1x32xf32> to vector<1x8x32xf32>
    %88 = arith.addf %85, %87 : vector<1x8x32xf32>
    %89 = vector.shape_cast %88 : vector<1x8x32xf32> to vector<1x2x128xf32>
    %c0_26 = arith.constant 0 : index
    %c0_27 = arith.constant 0 : index
    %c0_28 = arith.constant 0 : index
    %90 = vector.load %arg7[%c0_26, %c0_27, %c0_28] : memref<1x2x128xf32, #tpu.memory_space<vmem>>, vector<1x2x128xf32>
    tpu.vector_store %arg7[%c0_26, %c0_27, %c0_28], %89 {strides = array<i32>} : memref<1x2x128xf32, #tpu.memory_space<vmem>>, vector<1x2x128xf32>,
    return
  }
  func.func @transform_0(%arg0: i32, %arg1: i32) -> (i32, i32, i32) {
    %c0_i32 = arith.constant 0 : i32
    %c0_i32_0 = arith.constant 0 : i32
    return %arg0, %arg1, %c0_i32 : i32, i32, i32
  }
  func.func @transform_1(%arg0: i32, %arg1: i32) -> (i32, i32) {
    %c0_i32 = arith.constant 0 : i32
    %c0_i32_0 = arith.constant 0 : i32
    %c0_i32_1 = arith.constant 0 : i32
    return %c0_i32, %c0_i32_0 : i32, i32
  }
  func.func @transform_2(%arg0: i32, %arg1: i32) -> (i32, i32) {
    %c0_i32 = arith.constant 0 : i32
    %c0_i32_0 = arith.constant 0 : i32
    %c0_i32_1 = arith.constant 0 : i32
    return %c0_i32, %c0_i32_0 : i32, i32
  }
  func.func @transform_3(%arg0: i32, %arg1: i32) -> (i32, i32) {
    %c0_i32 = arith.constant 0 : i32
    %c0_i32_0 = arith.constant 0 : i32
    %c0_i32_1 = arith.constant 0 : i32
    return %c0_i32, %c0_i32_0 : i32, i32
  }
  func.func @transform_4(%arg0: i32, %arg1: i32) -> (i32, i32) {
    %c0_i32 = arith.constant 0 : i32
    %c0_i32_0 = arith.constant 0 : i32
    return %arg1, %c0_i32 : i32, i32
  }
  func.func @transform_5(%arg0: i32, %arg1: i32) -> (i32, i32, i32) {
    %c0_i32 = arith.constant 0 : i32
    %c0_i32_0 = arith.constant 0 : i32
    return %arg0, %arg1, %c0_i32 : i32, i32, i32
  }
}

module attributes {stable_mosaic.version = 11 : i64} {
  func.func @_embedding_kernel(%arg0: i32, %arg1: i32, %arg2: memref<1x8x48xf32, #tpu.memory_space<vmem>>, %arg3: memref<2x48xf32, #tpu.memory_space<vmem>>, %arg4: memref<48x32xf32, #tpu.memory_space<vmem>>, %arg5: memref<5x32xf32, #tpu.memory_space<vmem>>, %arg6: memref<8x32xf32, #tpu.memory_space<vmem>>, %arg7: memref<1x8x32xf32, #tpu.memory_space<vmem>>) attributes {dimension_semantics = [#tpu.dimension_semantics<parallel>, #tpu.dimension_semantics<parallel>], iteration_bounds = array<i64: 2, 1>, scalar_prefetch = 0 : i64, scratch_operands = 0 : i64, tpu.core_type = #tpu.core_type<tc>, window_params = [{transform_indices = @transform_0, window_bounds = array<i64: 1, 8, 48>}, {pipeline_mode = #tpu.pipeline_mode<synchronous>, transform_indices = @transform_1, window_bounds = array<i64: 2, 48>}, {pipeline_mode = #tpu.pipeline_mode<synchronous>, transform_indices = @transform_2, window_bounds = array<i64: 48, 32>}, {pipeline_mode = #tpu.pipeline_mode<synchronous>, transform_indices = @transform_3, window_bounds = array<i64: 5, 32>}, {transform_indices = @transform_4, window_bounds = array<i64: 8, 32>}, {transform_indices = @transform_5, window_bounds = array<i64: 1, 8, 32>}]} {
    %c0 = arith.constant 0 : index
    %c0_0 = arith.constant 0 : index
    %0 = vector.load %arg3[%c0, %c0_0] : memref<2x48xf32, #tpu.memory_space<vmem>>, vector<2x48xf32>
    %c0_1 = arith.constant 0 : index
    %c0_2 = arith.constant 0 : index
    %1 = vector.load %arg5[%c0_1, %c0_2] : memref<5x32xf32, #tpu.memory_space<vmem>>, vector<5x32xf32>
    %2 = vector.extract_strided_slice %0 {offsets = [0, 0], sizes = [1, 48], strides = [1, 1]} : vector<2x48xf32> to vector<1x48xf32>
    %3 = vector.extract_strided_slice %0 {offsets = [1, 0], sizes = [1, 48], strides = [1, 1]} : vector<2x48xf32> to vector<1x48xf32>
    %4 = vector.extract_strided_slice %1 {offsets = [0, 0], sizes = [1, 32], strides = [1, 1]} : vector<5x32xf32> to vector<1x32xf32>
    %5 = vector.extract_strided_slice %1 {offsets = [1, 0], sizes = [1, 32], strides = [1, 1]} : vector<5x32xf32> to vector<1x32xf32>
    %6 = vector.extract_strided_slice %1 {offsets = [2, 0], sizes = [1, 32], strides = [1, 1]} : vector<5x32xf32> to vector<1x32xf32>
    %7 = vector.extract_strided_slice %1 {offsets = [3, 0], sizes = [1, 32], strides = [1, 1]} : vector<5x32xf32> to vector<1x32xf32>
    %8 = vector.extract_strided_slice %1 {offsets = [4, 0], sizes = [1, 32], strides = [1, 1]} : vector<5x32xf32> to vector<1x32xf32>
    %c0_3 = arith.constant 0 : index
    %c0_4 = arith.constant 0 : index
    %c0_5 = arith.constant 0 : index
    %9 = vector.load %arg2[%c0_3, %c0_4, %c0_5] : memref<1x8x48xf32, #tpu.memory_space<vmem>>, vector<1x8x48xf32>
    %10 = vector.shape_cast %9 : vector<1x8x48xf32> to vector<8x48xf32>
    %cst = arith.constant dense<0.000000e+00> : vector<8xf32>
    %11 = vector.multi_reduction <add>, %10, %cst [1] : vector<8x48xf32> to vector<8xf32>
    %12 = vector.shape_cast %11 : vector<8xf32> to vector<8x1xf32>
    %cst_6 = arith.constant 4.800000e+01 : f32
    %13 = vector.broadcast %cst_6 : f32 to vector<8x1xf32>
    %14 = arith.divf %12, %13 : vector<8x1xf32>
    %15 = vector.broadcast %14 : vector<8x1xf32> to vector<8x48xf32>
    %16 = arith.subf %10, %15 : vector<8x48xf32>
    %17 = arith.mulf %16, %16 : vector<8x48xf32>
    %cst_7 = arith.constant dense<0.000000e+00> : vector<8xf32>
    %18 = vector.multi_reduction <add>, %17, %cst_7 [1] : vector<8x48xf32> to vector<8xf32>
    %19 = vector.shape_cast %18 : vector<8xf32> to vector<8x1xf32>
    %cst_8 = arith.constant 4.800000e+01 : f32
    %20 = vector.broadcast %cst_8 : f32 to vector<8x1xf32>
    %21 = arith.divf %19, %20 : vector<8x1xf32>
    %22 = vector.broadcast %14 : vector<8x1xf32> to vector<8x48xf32>
    %23 = arith.subf %10, %22 : vector<8x48xf32>
    %cst_9 = arith.constant 9.99999974E-6 : f32
    %24 = vector.broadcast %cst_9 : f32 to vector<8x1xf32>
    %25 = arith.addf %21, %24 : vector<8x1xf32>
    %26 = math.rsqrt %25 : vector<8x1xf32>
    %27 = vector.broadcast %26 : vector<8x1xf32> to vector<8x48xf32>
    %28 = arith.mulf %23, %27 : vector<8x48xf32>
    %29 = vector.broadcast %2 : vector<1x48xf32> to vector<8x48xf32>
    %30 = arith.mulf %28, %29 : vector<8x48xf32>
    %31 = vector.broadcast %3 : vector<1x48xf32> to vector<8x48xf32>
    %32 = arith.addf %30, %31 : vector<8x48xf32>
    %c0_10 = arith.constant 0 : index
    %c0_11 = arith.constant 0 : index
    %33 = vector.load %arg4[%c0_10, %c0_11] : memref<48x32xf32, #tpu.memory_space<vmem>>, vector<48x32xf32>
    %cst_12 = arith.constant dense<0.000000e+00> : vector<8x32xf32>
    %34 = tpu.matmul %32, %33, %cst_12 {dimension_numbers = #tpu.dot_dimension_numbers<[1], [0], [0], [1], [0, 0, 1, 1], [], []>} : vector<8x48xf32>, vector<48x32xf32>, vector<8x32xf32> -> vector<8x32xf32>
    %35 = vector.broadcast %4 : vector<1x32xf32> to vector<8x32xf32>
    %36 = arith.addf %34, %35 : vector<8x32xf32>
    %cst_13 = arith.constant 0.000000e+00 : f32
    %37 = vector.broadcast %cst_13 : f32 to vector<8x32xf32>
    %38 = arith.maximumf %36, %37 : vector<8x32xf32>
    %cst_14 = arith.constant dense<0.000000e+00> : vector<8xf32>
    %39 = vector.multi_reduction <add>, %38, %cst_14 [1] : vector<8x32xf32> to vector<8xf32>
    %40 = vector.shape_cast %39 : vector<8xf32> to vector<8x1xf32>
    %cst_15 = arith.constant 3.200000e+01 : f32
    %41 = vector.broadcast %cst_15 : f32 to vector<8x1xf32>
    %42 = arith.divf %40, %41 : vector<8x1xf32>
    %43 = vector.broadcast %42 : vector<8x1xf32> to vector<8x32xf32>
    %44 = arith.subf %38, %43 : vector<8x32xf32>
    %45 = arith.mulf %44, %44 : vector<8x32xf32>
    %cst_16 = arith.constant dense<0.000000e+00> : vector<8xf32>
    %46 = vector.multi_reduction <add>, %45, %cst_16 [1] : vector<8x32xf32> to vector<8xf32>
    %47 = vector.shape_cast %46 : vector<8xf32> to vector<8x1xf32>
    %cst_17 = arith.constant 3.200000e+01 : f32
    %48 = vector.broadcast %cst_17 : f32 to vector<8x1xf32>
    %49 = arith.divf %47, %48 : vector<8x1xf32>
    %50 = vector.broadcast %42 : vector<8x1xf32> to vector<8x32xf32>
    %51 = arith.subf %38, %50 : vector<8x32xf32>
    %cst_18 = arith.constant 9.99999974E-6 : f32
    %52 = vector.broadcast %cst_18 : f32 to vector<8x1xf32>
    %53 = arith.addf %49, %52 : vector<8x1xf32>
    %54 = math.rsqrt %53 : vector<8x1xf32>
    %55 = vector.broadcast %54 : vector<8x1xf32> to vector<8x32xf32>
    %56 = arith.mulf %51, %55 : vector<8x32xf32>
    %57 = vector.broadcast %5 : vector<1x32xf32> to vector<8x32xf32>
    %58 = arith.mulf %56, %57 : vector<8x32xf32>
    %59 = vector.broadcast %6 : vector<1x32xf32> to vector<8x32xf32>
    %60 = arith.addf %58, %59 : vector<8x32xf32>
    %61 = vector.shape_cast %60 : vector<8x32xf32> to vector<1x8x32xf32>
    %c0_19 = arith.constant 0 : index
    %c0_20 = arith.constant 0 : index
    %62 = vector.load %arg6[%c0_19, %c0_20] : memref<8x32xf32, #tpu.memory_space<vmem>>, vector<8x32xf32>
    %63 = vector.shape_cast %62 : vector<8x32xf32> to vector<1x8x32xf32>
    %64 = arith.addf %61, %63 : vector<1x8x32xf32>
    %cst_21 = arith.constant dense<0.000000e+00> : vector<1x8xf32>
    %65 = vector.multi_reduction <add>, %64, %cst_21 [2] : vector<1x8x32xf32> to vector<1x8xf32>
    %66 = vector.shape_cast %65 : vector<1x8xf32> to vector<1x8x1xf32>
    %cst_22 = arith.constant 3.200000e+01 : f32
    %67 = vector.broadcast %cst_22 : f32 to vector<1x8x1xf32>
    %68 = arith.divf %66, %67 : vector<1x8x1xf32>
    %69 = vector.broadcast %68 : vector<1x8x1xf32> to vector<1x8x32xf32>
    %70 = arith.subf %64, %69 : vector<1x8x32xf32>
    %71 = arith.mulf %70, %70 : vector<1x8x32xf32>
    %cst_23 = arith.constant dense<0.000000e+00> : vector<1x8xf32>
    %72 = vector.multi_reduction <add>, %71, %cst_23 [2] : vector<1x8x32xf32> to vector<1x8xf32>
    %73 = vector.shape_cast %72 : vector<1x8xf32> to vector<1x8x1xf32>
    %cst_24 = arith.constant 3.200000e+01 : f32
    %74 = vector.broadcast %cst_24 : f32 to vector<1x8x1xf32>
    %75 = arith.divf %73, %74 : vector<1x8x1xf32>
    %76 = vector.broadcast %68 : vector<1x8x1xf32> to vector<1x8x32xf32>
    %77 = arith.subf %64, %76 : vector<1x8x32xf32>
    %cst_25 = arith.constant 9.99999974E-6 : f32
    %78 = vector.broadcast %cst_25 : f32 to vector<1x8x1xf32>
    %79 = arith.addf %75, %78 : vector<1x8x1xf32>
    %80 = math.rsqrt %79 : vector<1x8x1xf32>
    %81 = vector.broadcast %80 : vector<1x8x1xf32> to vector<1x8x32xf32>
    %82 = arith.mulf %77, %81 : vector<1x8x32xf32>
    %83 = vector.shape_cast %7 : vector<1x32xf32> to vector<1x1x32xf32>
    %84 = vector.broadcast %83 : vector<1x1x32xf32> to vector<1x8x32xf32>
    %85 = arith.mulf %82, %84 : vector<1x8x32xf32>
    %86 = vector.shape_cast %8 : vector<1x32xf32> to vector<1x1x32xf32>
    %87 = vector.broadcast %86 : vector<1x1x32xf32> to vector<1x8x32xf32>
    %88 = arith.addf %85, %87 : vector<1x8x32xf32>
    %c0_26 = arith.constant 0 : index
    %c0_27 = arith.constant 0 : index
    %c0_28 = arith.constant 0 : index
    %89 = vector.load %arg7[%c0_26, %c0_27, %c0_28] : memref<1x8x32xf32, #tpu.memory_space<vmem>>, vector<1x8x32xf32>
    tpu.vector_store %arg7[%c0_26, %c0_27, %c0_28], %88 {strides = array<i32>} : memref<1x8x32xf32, #tpu.memory_space<vmem>>, vector<1x8x32xf32>,
    return
  }
  func.func @transform_0(%arg0: i32, %arg1: i32) -> (i32, i32, i32) {
    %c0_i32 = arith.constant 0 : i32
    %c0_i32_0 = arith.constant 0 : i32
    return %arg0, %arg1, %c0_i32 : i32, i32, i32
  }
  func.func @transform_1(%arg0: i32, %arg1: i32) -> (i32, i32) {
    %c0_i32 = arith.constant 0 : i32
    %c0_i32_0 = arith.constant 0 : i32
    %c0_i32_1 = arith.constant 0 : i32
    return %c0_i32, %c0_i32_0 : i32, i32
  }
  func.func @transform_2(%arg0: i32, %arg1: i32) -> (i32, i32) {
    %c0_i32 = arith.constant 0 : i32
    %c0_i32_0 = arith.constant 0 : i32
    %c0_i32_1 = arith.constant 0 : i32
    return %c0_i32, %c0_i32_0 : i32, i32
  }
  func.func @transform_3(%arg0: i32, %arg1: i32) -> (i32, i32) {
    %c0_i32 = arith.constant 0 : i32
    %c0_i32_0 = arith.constant 0 : i32
    %c0_i32_1 = arith.constant 0 : i32
    return %c0_i32, %c0_i32_0 : i32, i32
  }
  func.func @transform_4(%arg0: i32, %arg1: i32) -> (i32, i32) {
    %c0_i32 = arith.constant 0 : i32
    %c0_i32_0 = arith.constant 0 : i32
    return %arg1, %c0_i32 : i32, i32
  }
  func.func @transform_5(%arg0: i32, %arg1: i32) -> (i32, i32, i32) {
    %c0_i32 = arith.constant 0 : i32
    %c0_i32_0 = arith.constant 0 : i32
    return %arg0, %arg1, %c0_i32 : i32, i32, i32
  }
}

</mosaic_0001>

<llo_original>
// kernel: tpu_custom_call.1
$region0: #{tpu_custom_call.1}
  #allocation0 [shape = 'u32[]', space=smem, size = 0x4, offset = 0x4, fixed_abs, tag = 'smem constant byte address 0x4 - core index']
  #allocation1 [shape = 'u32[144,128]{1,0:T(1,128)}', space=vmem, size = 0x12000, scoped, tag = 'internal scratch']
  %s0 = inlined_call_operand.vmem [shape: f32[2,8,48], index: 0, kind: input, shape index: {}]
  %s1 = inlined_call_operand.vmem [shape: f32[2,48], index: 1, kind: input, shape index: {}]
  %s2 = inlined_call_operand.vmem [shape: f32[48,32], index: 2, kind: input, shape index: {}]
  %s3 = inlined_call_operand.vmem [shape: f32[5,32], index: 3, kind: input, shape index: {}]
  %s4 = inlined_call_operand.vmem [shape: f32[8,32], index: 4, kind: input, shape index: {}]
  %s5 = inlined_call_operand.hbm [shape: f32[2,8,32], index: 5, kind: output, shape index: {}]
  %s6 = sld [smem:[#allocation0]]
  $region53: #{tpu_custom_call.1} parent=0
    _
  %s8 = ssub.s32 1, %s6
  %s9 = scalar_select 0, %s8, %s6
  $region1: #{tpu_custom_call.1} parent=0
    #allocation2 [shape = 'u8[8192]{0}', space=vmem, size = 0x2000, scoped, tag = 'output window, operand 0']
    #allocation3 [shape = 's32[2]{0}', space=sflag, size = 0x8, scoped, tag = 'scoped memory for tpu_custom_call.1']
    %10 = vsyncpa [#allocation3], 0
    %s11 = scalar_lea.sflag [#allocation3], 1
    %12 = vsyncpa %s11, 0
    loop: start=0, step=1, limit=4
    $region2: #{tpu_custom_call.1} parent=1 // loop_pre_header
      _
    $region3: #{tpu_custom_call.1} parent=1 // loop_header
      %s14 = sphi 0, %s18
      %p15 = scmp.ge.s32.totalorder %s14, 4
      %s21 = sphi 0, %s33
      %s22 = sphi 0, %s29
      %s23 = sphi 0, %s21
      %s24 = sphi 0, %s22
      %s25 = sphi 0, %s23
      %s26 = sphi 0, %s24
      %s38 = sphi 0, %s40
      %s41 = sphi 0, %s38
      %s42 = sphi 0, %s41
      %s58 = sphi 0, %s42
      %s62 = sphi 0, %s62
      %s64 = sphi 0, %s62
      %s65 = sphi 0, %s64
      %s79 = sphi 0, %s65
      %s83 = sphi 0, %s83
      %s85 = sphi 0, %s83
      %s86 = sphi 0, %s85
      %s100 = sphi 0, %s86
      %s104 = sphi 0, %s104
      %s106 = sphi 0, %s104
      %s107 = sphi 0, %s106
      %s121 = sphi 0, %s107
      %s127 = sphi 0, %s129
      %s130 = sphi 0, %s127
      %s131 = sphi 0, %s130
      %s147 = sphi 0, %s131
      %s155 = sphi 0, %s157
      %s158 = sphi 0, %s155
      %s159 = sphi 0, %s158
      %s175 = sphi 0, %s159
    $region4: #{tpu_custom_call.1} parent=1 // loop_header_branch
      %17 = sbr.rel (%p15) target = $region8
    $region5: #{tpu_custom_call.1} parent=1 // loop_body
      %s19 = ssub.s32 %s14, 1
      %s20 = ssub.s32 %s14, 2
      %s27 = sadd.s32 1, %s22
      %p28 = scmp.ge.s32.totalorder %s27, 1
      %s29 = scalar_select %p28, 0, %s27
      %s30 = sadd.s32 1, %s21
      %s31 = scalar_select %p28, %s30, %s21
      %p32 = scmp.ge.s32.totalorder %s31, 2
      %s33 = scalar_select %p32, 0, %s31
      %s34 = ssub.s32 %s21, %s33
      %s35 = ssub.s32 %s22, %s29
      %s36 = sor.u32 %s34, %s35
      %p37 = scmp.eq.s32.totalorder %s36, 0
      %s39 = sadd.s32 %s38, 1
      %s40 = scalar_select %p37, %s38, %s39
      %p43 = pneg %p37
      %p44 = scmp.eq.s32.totalorder %s14, 1
      %p45 = por %p43, %p44
      %p46 = scmp.ne.s32.totalorder %s38, %s41
      %p47 = scmp.eq.s32.totalorder %s14, 0
      %p48 = por %p46, %p47
      %p49 = scmp.ne.s32.totalorder %s38, %s41
      %p50 = scmp.eq.s32.totalorder %s19, 1
      %p51 = por %p49, %p50
      %p52 = scmp.ne.s32.totalorder %s41, %s42
      %p53 = scmp.eq.s32.totalorder %s19, 0
      %p54 = por %p52, %p53
      %p55 = scmp.ne.s32.totalorder %s41, %s42
      %p56 = scmp.eq.s32.totalorder %s20, 1
      %p57 = por %p55, %p56
      %p59 = scmp.ne.s32.totalorder %s42, %s58
      %p60 = scmp.eq.s32.totalorder %s20, 0
      %p61 = por %p59, %p60
      %s63 = sadd.s32 %s62, 1
      %p66 = scmp.eq.s32.totalorder %s14, 1
      %p67 = scmp.ne.s32.totalorder %s62, %s64
      %p68 = scmp.eq.s32.totalorder %s14, 0
      %p69 = por %p67, %p68
      %p70 = scmp.ne.s32.totalorder %s62, %s64
      %p71 = scmp.eq.s32.totalorder %s19, 1
      %p72 = por %p70, %p71
      %p73 = scmp.ne.s32.totalorder %s64, %s65
      %p74 = scmp.eq.s32.totalorder %s19, 0
      %p75 = por %p73, %p74
      %p76 = scmp.ne.s32.totalorder %s64, %s65
      %p77 = scmp.eq.s32.totalorder %s20, 1
      %p78 = por %p76, %p77
      %p80 = scmp.ne.s32.totalorder %s65, %s79
      %p81 = scmp.eq.s32.totalorder %s20, 0
      %p82 = por %p80, %p81
      %s84 = sadd.s32 %s83, 1
      %p87 = scmp.eq.s32.totalorder %s14, 1
      %p88 = scmp.ne.s32.totalorder %s83, %s85
      %p89 = scmp.eq.s32.totalorder %s14, 0
      %p90 = por %p88, %p89
      %p91 = scmp.ne.s32.totalorder %s83, %s85
      %p92 = scmp.eq.s32.totalorder %s19, 1
      %p93 = por %p91, %p92
      %p94 = scmp.ne.s32.totalorder %s85, %s86
      %p95 = scmp.eq.s32.totalorder %s19, 0
      %p96 = por %p94, %p95
      %p97 = scmp.ne.s32.totalorder %s85, %s86
      %p98 = scmp.eq.s32.totalorder %s20, 1
      %p99 = por %p97, %p98
      %p101 = scmp.ne.s32.totalorder %s86, %s100
      %p102 = scmp.eq.s32.totalorder %s20, 0
      %p103 = por %p101, %p102
      %s105 = sadd.s32 %s104, 1
      %p108 = scmp.eq.s32.totalorder %s14, 1
      %p109 = scmp.ne.s32.totalorder %s104, %s106
      %p110 = scmp.eq.s32.totalorder %s14, 0
      %p111 = por %p109, %p110
      %p112 = scmp.ne.s32.totalorder %s104, %s106
      %p113 = scmp.eq.s32.totalorder %s19, 1
      %p114 = por %p112, %p113
      %p115 = scmp.ne.s32.totalorder %s106, %s107
      %p116 = scmp.eq.s32.totalorder %s19, 0
      %p117 = por %p115, %p116
      %p118 = scmp.ne.s32.totalorder %s106, %s107
      %p119 = scmp.eq.s32.totalorder %s20, 1
      %p120 = por %p118, %p119
      %p122 = scmp.ne.s32.totalorder %s107, %s121
      %p123 = scmp.eq.s32.totalorder %s20, 0
      %p124 = por %p122, %p123
      %s125 = ssub.s32 %s22, %s29
      %p126 = scmp.eq.s32.totalorder %s125, 0
      %s128 = sadd.s32 %s127, 1
      %s129 = scalar_select %p126, %s127, %s128
      %p132 = pneg %p126
      %p133 = scmp.eq.s32.totalorder %s14, 1
      %p134 = por %p132, %p133
      %p135 = scmp.ne.s32.totalorder %s127, %s130
      %p136 = scmp.eq.s32.totalorder %s14, 0
      %p137 = por %p135, %p136
      %p138 = scmp.ne.s32.totalorder %s127, %s130
      %p139 = scmp.eq.s32.totalorder %s19, 1
      %p140 = por %p138, %p139
      %p141 = scmp.ne.s32.totalorder %s130, %s131
      %p142 = scmp.eq.s32.totalorder %s19, 0
      %p143 = por %p141, %p142
      %p144 = scmp.ne.s32.totalorder %s130, %s131
      %p145 = scmp.eq.s32.totalorder %s20, 1
      %p146 = por %p144, %p145
      %p148 = scmp.ne.s32.totalorder %s131, %s147
      %p149 = scmp.eq.s32.totalorder %s20, 0
      %p150 = por %p148, %p149
      %s151 = ssub.s32 %s21, %s33
      %s152 = ssub.s32 %s22, %s29
      %s153 = sor.u32 %s151, %s152
      %p154 = scmp.eq.s32.totalorder %s153, 0
      %s156 = sadd.s32 %s155, 1
      %s157 = scalar_select %p154, %s155, %s156
      %p160 = pneg %p154
      %p161 = scmp.eq.s32.totalorder %s14, 1
      %p162 = por %p160, %p161
      %p163 = scmp.ne.s32.totalorder %s155, %s158
      %p164 = scmp.eq.s32.totalorder %s14, 0
      %p165 = por %p163, %p164
      %p166 = scmp.ne.s32.totalorder %s155, %s158
      %p167 = scmp.eq.s32.totalorder %s19, 1
      %p168 = por %p166, %p167
      %p169 = scmp.ne.s32.totalorder %s158, %s159
      %p170 = scmp.eq.s32.totalorder %s19, 0
      %p171 = por %p169, %p170
      %p172 = scmp.ne.s32.totalorder %s158, %s159
      %p173 = scmp.eq.s32.totalorder %s20, 1
      %p174 = por %p172, %p173
      %p176 = scmp.ne.s32.totalorder %s159, %s175
      %p177 = scmp.eq.s32.totalorder %s20, 0
      %p178 = por %p176, %p177
      %p179 = scmp.le.s32.totalorder 1, %s14
      %p180 = scmp.lt.s32.totalorder %s14, 3
      %p181 = pnand %p179, %p180
      %p182 = pneg %p181
      // Predicated region
      $region9: #{tpu_custom_call.1} parent=5 // pred_check
        _
      $region10: #{tpu_custom_call.1} parent=5 // pred_check_branch
        %184 = sbr.rel (%p181) target = $region12
      $region11: #{tpu_custom_call.1} parent=5 // pred_region
        %s185 = ssub.s32 %s14, 1
        // Predicated region
        $region13: #{tpu_custom_call.1} parent=11 // pred_check
          %p186 = pneg %p75
        $region14: #{tpu_custom_call.1} parent=11 // pred_check_branch
          %188 = sbr.rel (%p186) target = $region16
        $region15: #{tpu_custom_call.1} parent=11 // pred_region
          _
        $region16: #{tpu_custom_call.1} parent=11 // pred_fallthru
          _
        // Predicated region
        $region17: #{tpu_custom_call.1} parent=11 // pred_check
          %p189 = pneg %p96
        $region18: #{tpu_custom_call.1} parent=11 // pred_check_branch
          %191 = sbr.rel (%p189) target = $region20
        $region19: #{tpu_custom_call.1} parent=11 // pred_region
          _
        $region20: #{tpu_custom_call.1} parent=11 // pred_fallthru
          _
        // Predicated region
        $region21: #{tpu_custom_call.1} parent=11 // pred_check
          %p192 = pneg %p117
        $region22: #{tpu_custom_call.1} parent=11 // pred_check_branch
          %194 = sbr.rel (%p192) target = $region24
        $region23: #{tpu_custom_call.1} parent=11 // pred_region
          _
        $region24: #{tpu_custom_call.1} parent=11 // pred_fallthru
          _
        // Predicated region
        $region25: #{tpu_custom_call.1} parent=11 // pred_check
          %p195 = pneg %p143
        $region26: #{tpu_custom_call.1} parent=11 // pred_check_branch
          %197 = sbr.rel (%p195) target = $region28
        $region27: #{tpu_custom_call.1} parent=11 // pred_region
          %p198 = scmp.lt.s32.totalorder %s24, 0
          %s199 = scalar_select %p198, %s24, 0
          %s200 = smul.addr %s199, 8
          %s201 = scalar_lea.vmem %s4, %s200
        $region28: #{tpu_custom_call.1} parent=11 // pred_fallthru
          _
      $region12: #{tpu_custom_call.1} parent=5 // pred_fallthru
        _
      %p202 = scmp.lt.s32.totalorder %s14, 2
      // Predicated region
      $region29: #{tpu_custom_call.1} parent=5 // pred_check
        %p203 = pneg %p202
      $region30: #{tpu_custom_call.1} parent=5 // pred_check_branch
        %205 = sbr.rel (%p203) target = $region32
      $region31: #{tpu_custom_call.1} parent=5 // pred_region
        // Predicated region
        $region33: #{tpu_custom_call.1} parent=31 // pred_check
          %p206 = pneg %p48
        $region34: #{tpu_custom_call.1} parent=31 // pred_check_branch
          %208 = sbr.rel (%p206) target = $region36
        $region35: #{tpu_custom_call.1} parent=31 // pred_region
          %p209 = scmp.lt.s32.totalorder %s21, 1
          %s210 = scalar_select %p209, %s21, 1
          %p211 = scmp.lt.s32.totalorder %s22, 0
          %s212 = scalar_select %p211, %s22, 0
          %s213 = sadd.s32 %s212, %s210
          %s214 = smul.addr %s213, 8
          %s215 = scalar_lea.vmem %s0, %s214
        $region36: #{tpu_custom_call.1} parent=31 // pred_fallthru
          _
      $region32: #{tpu_custom_call.1} parent=5 // pred_fallthru
        _
      %p216 = scmp.le.s32.totalorder 1, %s14
      %p217 = scmp.lt.s32.totalorder %s14, 3
      %p218 = pnand %p216, %p217
      %p219 = pneg %p218
      // Predicated region
      $region37: #{tpu_custom_call.1} parent=5 // pred_check
        _
      $region38: #{tpu_custom_call.1} parent=5 // pred_check_branch
        %221 = sbr.rel (%p218) target = $region40
      $region39: #{tpu_custom_call.1} parent=5 // pred_region
        %s222 = ssub.s32 %s14, 1
        %p223 = scmp.lt.s32.totalorder %s23, 1
        %s224 = scalar_select %p223, %s23, 1
        %p225 = scmp.lt.s32.totalorder %s24, 0
        %s226 = scalar_select %p225, %s24, 0
        %s227 = sadd.s32 %s226, %s224
        %s228 = smul.addr %s227, 8
        %s229 = scalar_lea.vmem %s0, %s228
        %p230 = pneg %p54
        %p231 = pneg %p51
        %p232 = pneg %p75
        %p233 = pneg %p72
        %p234 = pneg %p96
        %p235 = pneg %p93
        %p236 = pneg %p117
        %p237 = pneg %p114
        %p238 = scmp.lt.s32.totalorder %s24, 0
        %s239 = scalar_select %p238, %s24, 0
        %s240 = smul.addr %s239, 8
        %s241 = scalar_lea.vmem %s4, %s240
        %p242 = pneg %p143
        %p243 = pneg %p140
        %p244 = pneg %p171
        %p245 = pneg %p168
        %s246 = sand.u32 %s158, 1
        %s247 = scalar_lea.sflag [#allocation3], %s246
        %s248 = sand.u32 %s158, 1
        %s249 = smul.addr %s248, 8
        %s250 = scalar_lea.vmem [#allocation2], %s249
        %p251 = scmp.lt.s32.totalorder %s23, 1
        %s252 = scalar_select %p251, %s23, 1
        %p253 = scmp.lt.s32.totalorder %s24, 0
        %s254 = scalar_select %p253, %s24, 0
        %s255 = sadd.s32 %s254, %s252
        %s256 = smul.addr %s255, 8
        %s257 = scalar_lea.vmem %s0, %s256
        %p258 = scmp.lt.s32.totalorder %s24, 0
        %s259 = scalar_select %p258, %s24, 0
        %s260 = smul.addr %s259, 8
        %s261 = scalar_lea.vmem %s4, %s260
        %v262 = vld [vmem:[%s1] sm:$0x3]
        %v263 = vld [vmem:[%s3] sm:$0x1f]
        %v264 = vld [vmem:[%s257] sm:$0xff]
        %vm265 = vcmask 392192
        %v266 = vsel %vm265, %v264, 0.0
        %267 = vadd.xlane.f32.xlu0 %v266
        %v268 = vpop.xlane.xlu0 %267
        %v269 = vrcp.pop 48.0
        %v270 = vmul.f32 %v268, %v269
        %v271 = vsub.f32 %v264, %v270
        %v272 = vmul.f32 %v271, %v271
        %v273 = vsel %vm265, %v272, 0.0
        %274 = vadd.xlane.f32.xlu0 %v273
        %v275 = vpop.xlane.xlu0 %274
        %v276 = vmul.f32 %v275, %v269
        %v277 = vadd.f32 %v276, 1e-05
        %v278 = vrsqrt.pop %v277
        %v279 = vmul.f32 %v271, %v278
        %v280 = vlaneseq
        %v281 = vshrl.u32 %v280, 7
        %v282 = vsub.s32 0, %v281
        %v283 = vrot.slane %v262, %v282
        %v284 = vmul.f32 %v279, %v283
        %v285 = vlaneseq
        %v286 = vshrl.u32 %v285, 7
        %v287 = vsub.s32 1, %v286
        %v288 = vrot.slane %v262, %v287
        %v289 = vadd.f32 %v284, %v288
        %v290 = vld [vmem:[%s2] sm:$0xff]
        %v291 = vld [vmem:[%s2 + $0x8] sm:$0xff]
        %v292 = vld [vmem:[%s2 + $0x10] sm:$0xff]
        %v293 = vld [vmem:[%s2 + $0x18] sm:$0xff]
        %v294 = vld [vmem:[%s2 + $0x20] sm:$0xff]
        %v295 = vld [vmem:[%s2 + $0x28] sm:$0xff]
        %v296 = vlaneseq
        %v297 = vshrl.u32 %v296, 7
        %v298 = vsub.s32 0, %v297
        %v299 = vrot.slane %v263, %v298
        %v301 = vsel %vm265, %v289, 0
        %303 = vmatprep.subr.mxu0 0.0
        %304 = vmatpush1.msra.mxu0 0.0
        %305 = vmatprep.subr.mxu0 0.0
        %306 = vmatpush1.msra.mxu0 0.0
        %307 = vmatprep.subr.mxu0 0.0
        %308 = vmatpush1.msra.mxu0 0.0
        %309 = vmatprep.subr.mxu0 0.0
        %310 = vmatpush1.msra.mxu0 0.0
        %311 = vmatprep.subr.mxu0 0.0
        %312 = vmatpush1.msra.mxu0 0.0
        %313 = vmatprep.subr.mxu0 0.0
        %314 = vmatpush1.msra.mxu0 0.0
        %315 = vmatprep.subr.mxu0 0.0
        %316 = vmatpush1.msra.mxu0 0.0
        %317 = vmatprep.subr.mxu0 0.0
        %318 = vmatpush1.msra.mxu0 0.0
        %319 = vmatprep.subr.mxu0 0.0
        %320 = vmatpush1.msra.mxu0 0.0
        %321 = vmatprep.subr.mxu0 0.0
        %322 = vmatpush1.msra.mxu0 0.0
        %323 = vmatprep.subr.mxu0 0.0
        %324 = vmatpush1.msra.mxu0 %v295
        %325 = vmatprep.subr.mxu0 0.0
        %326 = vmatpush1.msra.mxu0 %v294
        %327 = vmatprep.subr.mxu0 0.0
        %328 = vmatpush1.msra.mxu0 %v293
        %329 = vmatprep.subr.mxu0 0.0
        %330 = vmatpush1.msra.mxu0 %v292
        %331 = vmatprep.subr.mxu0 0.0
        %332 = vmatpush1.msra.mxu0 %v291
        %333 = vmatprep.subr.mxu0 0.0
        %334 = vmatpush1.msra.mxu0 %v290
        %335 = vmatprep.subr.mxu0 0.0
        %336 = vmatpush2.msra.mxu0 0.0
        %337 = vmatprep.subr.mxu0 0.0
        %338 = vmatpush2.msra.mxu0 0.0
        %339 = vmatprep.subr.mxu0 0.0
        %340 = vmatpush2.msra.mxu0 0.0
        %341 = vmatprep.subr.mxu0 0.0
        %342 = vmatpush2.msra.mxu0 0.0
        %343 = vmatprep.subr.mxu0 0.0
        %344 = vmatpush2.msra.mxu0 0.0
        %345 = vmatprep.subr.mxu0 0.0
        %346 = vmatpush2.msra.mxu0 0.0
        %347 = vmatprep.subr.mxu0 0.0
        %348 = vmatpush2.msra.mxu0 0.0
        %349 = vmatprep.subr.mxu0 0.0
        %350 = vmatpush2.msra.mxu0 0.0
        %351 = vmatprep.subr.mxu0 0.0
        %352 = vmatpush2.msra.mxu0 0.0
        %353 = vmatprep.subr.mxu0 0.0
        %354 = vmatpush2.msra.mxu0 0.0
        %355 = vmatprep.subr.mxu0 0.0
        %356 = vmatpush2.msra.mxu0 0.0
        %357 = vmatprep.subr.mxu0 0.0
        %358 = vmatpush2.msra.mxu0 0.0
        %359 = vmatprep.subr.mxu0 0.0
        %360 = vmatpush2.msra.mxu0 0.0
        %361 = vmatprep.subr.mxu0 0.0
        %362 = vmatpush2.msra.mxu0 0.0
        %363 = vmatprep.subr.mxu0 0.0
        %364 = vmatpush2.msra.mxu0 0.0
        %365 = vmatprep.subr.mxu0 0.0
        %366 = vmatpush2.msra.mxu0 0.0
        %367 = vmatprep.mubr.f32.mxu0 0.0
        %368 = vmatmul.mubr.f32.gmra.mxu0 %v301
        %v369 = vpop.f32.mrf.mxu0
        %v370 = vadd.f32 %v299, %v369
        %v371 = vpop.f32.mrf.mxu0
        %372 = vdwg.mxu0
        %v373 = vmax.f32 %v370, 0.0
        %vm374 = vcmask 261120
        %v375 = vsel %vm374, %v373, 0.0
        %376 = vadd.xlane.f32.xlu0 %v375
        %v377 = vpop.xlane.xlu0 %376
        %v378 = vrcp.pop 32.0
        %v379 = vmul.f32 %v377, %v378
        %v380 = vsub.f32 %v373, %v379
        %v381 = vmul.f32 %v380, %v380
        %v382 = vsel %vm374, %v381, 0.0
        %383 = vadd.xlane.f32.xlu0 %v382
        %v384 = vpop.xlane.xlu0 %383
        %v385 = vmul.f32 %v384, %v378
        %v386 = vadd.f32 %v385, 1e-05
        %v387 = vrsqrt.pop %v386
        %v388 = vmul.f32 %v380, %v387
        %v389 = vlaneseq
        %v390 = vshrl.u32 %v389, 7
        %v391 = vsub.s32 1, %v390
        %v392 = vrot.slane %v263, %v391
        %v393 = vmul.f32 %v388, %v392
        %v394 = vlaneseq
        %v395 = vshrl.u32 %v394, 7
        %v396 = vsub.s32 2, %v395
        %v397 = vrot.slane %v263, %v396
        %v398 = vadd.f32 %v393, %v397
        %v399 = vld [vmem:[%s261] sm:$0xff]
        %v400 = vadd.f32 %v398, %v399
        %v401 = vsel %vm374, %v400, 0.0
        %402 = vadd.xlane.f32.xlu0 %v401
        %v403 = vpop.xlane.xlu0 %402
        %v404 = vmul.f32 %v403, %v378
        %v405 = vsub.f32 %v400, %v404
        %v406 = vmul.f32 %v405, %v405
        %v407 = vsel %vm374, %v406, 0.0
        %408 = vadd.xlane.f32.xlu0 %v407
        %v409 = vpop.xlane.xlu0 %408
        %v410 = vmul.f32 %v409, %v378
        %v411 = vadd.f32 %v410, 1e-05
        %v412 = vrsqrt.pop %v411
        %v413 = vmul.f32 %v405, %v412
        %v414 = vlaneseq
        %v415 = vshrl.u32 %v414, 7
        %v416 = vsub.s32 3, %v415
        %v417 = vrot.slane %v263, %v416
        %v418 = vmul.f32 %v413, %v417
        %v419 = vlaneseq
        %v420 = vshrl.u32 %v419, 7
        %v421 = vsub.s32 4, %v420
        %v422 = vrot.slane %v263, %v421
        %v423 = vadd.f32 %v418, %v422
        %424 = vst.msk [vmem:[%s250] sm:$0xff] %vm374, %v423
        %s425 = sand.u32 %s158, 1
        %s426 = scalar_lea.sflag [#allocation3], %s425
        %s427 = sand.u32 %s158, 1
        %s428 = smul.addr %s427, 8
        %s429 = scalar_lea.vmem [#allocation2], %s428
        // Predicated region
        $region41: #{tpu_custom_call.1} parent=39 // pred_check
          %p430 = pneg %p168
        $region42: #{tpu_custom_call.1} parent=39 // pred_check_branch
          %432 = sbr.rel (%p430) target = $region44
        $region43: #{tpu_custom_call.1} parent=39 // pred_region
          %s434 = ssub.s32 128, 128
          %435 = vsyncadd %s426, %s434
          %s436 = sadd.s32 %s24, %s23
          %s437 = smul.addr %s436, 128
          %s438 = scalar_lea.hbm %s5, %s437
          %s440 = sshll.u32 %s429, 4
          %s441 = int_to_ptr.vmem [resolvable:$true] %s440
          %443 = dma.vmem_to_hbm [thread:$0]  %s441, 128, %s438, %s426
        $region44: #{tpu_custom_call.1} parent=39 // pred_fallthru
          _
      $region40: #{tpu_custom_call.1} parent=5 // pred_fallthru
        _
      %p444 = scmp.le.s32.totalorder 2, %s14
      // Predicated region
      $region45: #{tpu_custom_call.1} parent=5 // pred_check
        %p445 = pneg %p444
      $region46: #{tpu_custom_call.1} parent=5 // pred_check_branch
        %447 = sbr.rel (%p445) target = $region48
      $region47: #{tpu_custom_call.1} parent=5 // pred_region
        %s448 = ssub.s32 %s14, 2
        // Predicated region
        $region49: #{tpu_custom_call.1} parent=47 // pred_check
          %p449 = pneg %p174
        $region50: #{tpu_custom_call.1} parent=47 // pred_check_branch
          %451 = sbr.rel (%p449) target = $region52
        $region51: #{tpu_custom_call.1} parent=47 // pred_region
          %s452 = sand.u32 %s159, 1
          %s453 = scalar_lea.sflag [#allocation3], %s452
          %s454 = sand.u32 %s159, 1
          %s455 = smul.addr %s454, 8
          %s456 = scalar_lea.vmem [#allocation2], %s455
          %457 = dma.done %s453, 128
        $region52: #{tpu_custom_call.1} parent=47 // pred_fallthru
          _
      $region48: #{tpu_custom_call.1} parent=5 // pred_fallthru
        _
    $region6: #{tpu_custom_call.1} parent=1 // loop_footer
      %s18 = sadd.s32 1, %s14
    $region7: #{tpu_custom_call.1} parent=1 // loop_footer_branch
      %13 = sbr.rel target = $region3
    $region8: #{tpu_custom_call.1} parent=1 // loop_exit
      _
    %458 = vsyncpa [#allocation3], 1
    %s459 = scalar_lea.sflag [#allocation3], 1
    %460 = vsyncpa %s459, 1

</llo_original>
